<compile_context>
chip_gen: v5e
topology: v5e:2x2
jax: 0.10.0
libtpu: 0.0.40
codegen_flags: <defaults>
</compile_context>

<pallas_src>
import math
from functools import partial

import jax
import jax.numpy as jnp
from jax import lax
from jax.experimental import pallas as pl
from jax.experimental.pallas import tpu as pltpu


def _pick_q_tile(T):
    """Largest query tile <= 256 that divides T and is a multiple of 8."""
    if T <= 256:
        return T
    for tq in (256, 128, 64, 32, 16, 8):
        if T % tq == 0:
            return tq
    return T


def _l2_attn_kernel(x_ref, qwf_ref, c_ref, woutT_ref, bout_ref,
                    out_ref, attn_ref, pxav_ref, *, num_heads, head_dim):
    """One grid step = one (batch element, query tile).

    x_ref:     (T, D)        full sequence for this batch element (keys/values)
    qwf_ref:   (D, D)        q_weight reshaped (D, H*hd), columns grouped per head
    c_ref:     (D, D)        precomputed C, columns grouped per head
    woutT_ref: (D, D)        out_proj.weight^T
    bout_ref:  (1, D)        out_proj.bias
    out_ref:   (TQ, D)       output rows for this query tile
    attn_ref:  (H, TQ, T)    attention weights for this query tile
    pxav_ref:  (TQ, D) f32   VMEM scratch accumulator (PXAV)
    """
    tq = out_ref.shape[0]
    inv_sqrt_hd = 1.0 / math.sqrt(head_dim)

    qi = pl.program_id(1)
    q_start = pl.multiple_of(qi * tq, tq)

    x = x_ref[...]                           # (T, D)  keys / value source
    x_q = x_ref[pl.ds(q_start, tq), :]       # (TQ, D) query rows of this tile

    qw = qwf_ref[...]
    # Head-batched projections; f32 accumulation on the MXU.
    k_all = jnp.dot(x, qw, preferred_element_type=jnp.float32)            # (T, D)
    q_all = jnp.dot(x_q, qw, preferred_element_type=jnp.float32)          # (TQ, D)
    xc = jnp.dot(x, c_ref[...], preferred_element_type=jnp.float32)       # (T, D)

    for h in range(num_heads):               # static, unrolled
        sl = slice(h * head_dim, (h + 1) * head_dim)
        k_h = k_all[:, sl]                   # (T, hd)
        q_h = q_all[:, sl]                   # (TQ, hd)

        sq_k = jnp.sum(k_h * k_h, axis=-1, keepdims=True)                 # (T, 1)
        sq_q = jnp.sum(q_h * q_h, axis=-1, keepdims=True)                 # (TQ, 1)
        gram = lax.dot_general(q_h, k_h, (((1,), (1,)), ((), ())),
                               preferred_element_type=jnp.float32)        # (TQ, T)
        # |q|^2 + |k|^2 - 2<q,k> may drift slightly negative in fp off the
        # diagonal; harmless under softmax.
        logits = -(sq_q + sq_k.T - 2.0 * gram) * inv_sqrt_hd
        # TODO(synk): attn_mask / attn_multiplier inputs not plumbed in
        # (forward path here corresponds to attn_mask=None, attn_multiplier=None).

        # softmax over the key axis (torch dim=1 of (T, S, B, H))
        m = jnp.max(logits, axis=-1, keepdims=True)
        e = jnp.exp(logits - m)
        denom = jnp.sum(e, axis=-1, keepdims=True)
        attn_w = e * pl.reciprocal(denom, approx=True)                    # (TQ, T)

        attn_ref[h] = attn_w.astype(attn_ref.dtype)

        # PXAV head slab: attn_w @ (x @ C)_h  -> lane-dense write into scratch.
        pxav_ref[:, sl] = jnp.dot(attn_w, xc[:, sl],
                                  preferred_element_type=jnp.float32)

    # out_proj: single full-width matmul.
    y = jnp.dot(pxav_ref[...], woutT_ref[...], preferred_element_type=jnp.float32)
    y = y + bout_ref[...].astype(jnp.float32)
    out_ref[...] = y.astype(out_ref.dtype)


def l2_multihead_attention(x, q_weight, v_weight, out_w, out_b, *, num_heads,
                           attn_dtype=jnp.float32):
    """x: (T, N, D).  Returns (out (T, N, D), attn_weights (T, T, N, H)).

    attn_dtype=jnp.bfloat16 halves the dominant HBM write if exact f32 attention
    weights are not required.
    """
    T, N, D = x.shape
    head_dim = D // num_heads
    assert head_dim * num_heads == D

    x_btd = jnp.transpose(x, (1, 0, 2))                         # (N, T, D)

    f32 = jnp.float32
    # Head-grouped flat Q weight: columns [h*hd:(h+1)*hd] == q_weight[:, h, :].
    qw_flat = q_weight.reshape(D, D).astype(f32)
    # Batch-invariant fold: C[:, h*hd:(h+1)*hd] = (qw_h qw_h^T / sqrt(hd)) @ vw_h
    A = jnp.einsum('mhd,nhd->hmn', q_weight, q_weight) / math.sqrt(head_dim)
    C = jnp.einsum('hmn,nhd->mhd', A, v_weight).reshape(D, D).astype(f32)
    woutT = out_w.T.astype(f32)                                 # (D, D)
    bout = out_b.reshape(1, D).astype(f32)                      # (1, D)

    tq = _pick_q_tile(T)
    n_q = T // tq

    # Rough VMEM budget (x2 for double buffering), clamped to stay safe on
    # v7x (64 MiB physical) while raising the default scoped limit if needed.
    attn_itemsize = jnp.dtype(attn_dtype).itemsize
    blk_bytes = (T * D * x.dtype.itemsize                       # x block
                 + tq * D * x.dtype.itemsize                    # out block
                 + num_heads * tq * T * attn_itemsize           # attn block
                 + 4 * D * D * 4 + tq * D * 4)                  # weights + scratch
    vmem_limit = int(min(64 * 1024 * 1024,
                         max(32 * 1024 * 1024, 2 * blk_bytes + (4 << 20))))

    kernel = partial(_l2_attn_kernel, num_heads=num_heads, head_dim=head_dim)

    out_btd, attn_bhts = pl.pallas_call(
        kernel,
        out_shape=(
            jax.ShapeDtypeStruct((N, T, D), x.dtype),
            jax.ShapeDtypeStruct((N, num_heads, T, T), attn_dtype),
        ),
        grid_spec=pltpu.PrefetchScalarGridSpec(
            num_scalar_prefetch=0,
            grid=(N, n_q),
            in_specs=[
                # full sequence for this batch element (keys / values source);
                # block index constant across qi -> stays resident in VMEM.
                pl.BlockSpec((None, T, D), lambda b, qi: (b, 0, 0)),
                pl.BlockSpec((D, D), lambda b, qi: (0, 0)),      # qw_flat
                pl.BlockSpec((D, D), lambda b, qi: (0, 0)),      # C
                pl.BlockSpec((D, D), lambda b, qi: (0, 0)),      # out_proj.weight^T
                pl.BlockSpec((1, D), lambda b, qi: (0, 0)),      # out_proj.bias
            ],
            out_specs=[
                pl.BlockSpec((None, tq, D), lambda b, qi: (b, qi, 0)),
                pl.BlockSpec((None, num_heads, tq, T),
                             lambda b, qi: (b, 0, qi, 0)),
            ],
            scratch_shapes=[pltpu.VMEM((tq, D), jnp.float32)],
        ),
        compiler_params=pltpu.CompilerParams(
            dimension_semantics=("parallel", "parallel"),
            vmem_limit_bytes=vmem_limit,
        ),
    )(x_btd, qw_flat, C, woutT, bout)

    out = jnp.transpose(out_btd, (1, 0, 2))                     # (T, N, D)
    # Torch layout (T, S, N, H).  Perf-critical callers can consume the
    # kernel-native (N, H, T, S) layout directly and skip this transpose.
    attn = jnp.transpose(attn_bhts, (2, 3, 0, 1)).astype(jnp.float32)
    return out, attn


def _reference(x, q_weight, v_weight, out_w, out_b, num_heads):
    """Pure-JAX reference mirroring the PyTorch forward (mask/multiplier None)."""
    T, N, D = x.shape
    hd = D // num_heads
    q = jnp.einsum('tbm,mhd->tbhd', x, q_weight)
    sq_t = jnp.einsum('tbhd,tbhd->tbh', q, q)
    sqd = sq_t[:, None] + sq_t[None, :] - 2.0 * jnp.einsum('tbhd,sbhd->tsbh', q, q)
    logits = -sqd / math.sqrt(hd)
    attn_w = jax.nn.softmax(logits, axis=1)
    A = jnp.einsum('mhd,nhd->hmn', q_weight, q_weight) / math.sqrt(hd)
    XA = jnp.einsum('tbm,hmn->tbhn', x, A)
    PXA = jnp.einsum('tsbh,sbhm->tbhm', attn_w, XA)
    PXAV = jnp.einsum('tbhm,mhd->tbhd', PXA, v_weight).reshape(T, N, D)
    out = PXAV @ out_w.T + out_b
    return out, attn_w


if __name__ == "__main__":
    # Small, deterministic setup: T=8 tokens, N=2 batch, D=32 embed, H=4 heads.
    T, N, D, H = 8, 2, 32, 4
    hd = D // H
    key = jax.random.PRNGKey(0)
    kx, kq, kv, kw, kb = jax.random.split(key, 5)

    # xavier_uniform on the (D, D) view: bound = sqrt(6 / (D + D))
    xav = math.sqrt(6.0 / (2 * D))
    q_weight = jax.random.uniform(kq, (D, H, hd), jnp.float32, -xav, xav)
    v_weight = jax.random.uniform(kv, (D, H, hd), jnp.float32, -xav, xav)
    # nn.Linear default init bounds
    lin_bound = 1.0 / math.sqrt(D)
    out_w = jax.random.uniform(kw, (D, D), jnp.float32, -lin_bound, lin_bound)
    out_b = jax.random.uniform(kb, (D,), jnp.float32, -lin_bound, lin_bound)

    x = jax.random.normal(kx, (T, N, D), jnp.float32)

    out, attn = l2_multihead_attention(x, q_weight, v_weight, out_w, out_b,
                                       num_heads=H)
    out = jax.block_until_ready(out)
    attn = jax.block_until_ready(attn)

    ref_out, ref_attn = _reference(x, q_weight, v_weight, out_w, out_b, H)
    # Tolerances account for pl.reciprocal(approx=True) in the softmax denom.
    assert jnp.allclose(out, ref_out, atol=5e-3, rtol=5e-3), \
        float(jnp.max(jnp.abs(out - ref_out)))
    assert jnp.allclose(attn, ref_attn, atol=2e-3, rtol=2e-3), \
        float(jnp.max(jnp.abs(attn - ref_attn)))

    # TODO(synk): rm_nonself_grads / SelfonlyGradients only alter the backward
    # pass (forward values are identical), so they are not modeled here.
    print("KERNEL_OK")
</pallas_src>

<mosaic_0001>
module attributes {stable_mosaic.version = 11 : i64} {
  func.func @_l2_attn_kernel(%arg0: i32, %arg1: i32, %arg2: memref<1x8x32xf32, #tpu.memory_space<vmem>>, %arg3: memref<32x32xf32, #tpu.memory_space<vmem>>, %arg4: memref<32x32xf32, #tpu.memory_space<vmem>>, %arg5: memref<32x32xf32, #tpu.memory_space<vmem>>, %arg6: memref<1x32xf32, #tpu.memory_space<vmem>>, %arg7: memref<1x8x32xf32, #tpu.memory_space<vmem>>, %arg8: memref<1x4x8x8xf32, #tpu.memory_space<vmem>>, %arg9: memref<8x32xf32, #tpu.memory_space<vmem>>) attributes {dimension_semantics = [#tpu.dimension_semantics<parallel>, #tpu.dimension_semantics<parallel>], iteration_bounds = array<i64: 2, 1>, scalar_prefetch = 0 : i64, scratch_operands = 1 : i64, tpu.core_type = #tpu.core_type<tc>, window_params = [{transform_indices = @transform_0, window_bounds = array<i64: 1, 8, 32>}, {pipeline_mode = #tpu.pipeline_mode<synchronous>, transform_indices = @transform_1, window_bounds = array<i64: 32, 32>}, {pipeline_mode = #tpu.pipeline_mode<synchronous>, transform_indices = @transform_2, window_bounds = array<i64: 32, 32>}, {pipeline_mode = #tpu.pipeline_mode<synchronous>, transform_indices = @transform_3, window_bounds = array<i64: 32, 32>}, {pipeline_mode = #tpu.pipeline_mode<synchronous>, transform_indices = @transform_4, window_bounds = array<i64: 1, 32>}, {transform_indices = @transform_5, window_bounds = array<i64: 1, 8, 32>}, {transform_indices = @transform_6, window_bounds = array<i64: 1, 4, 8, 8>}]} {
    %c8_i32 = arith.constant 8 : i32
    %0 = arith.muli %arg1, %c8_i32 : i32
    %1 = tpu.assume_multiple %0, 8 : i32
    %c0 = arith.constant 0 : index
    %c0_0 = arith.constant 0 : index
    %c0_1 = arith.constant 0 : index
    %2 = vector.load %arg2[%c0, %c0_0, %c0_1] : memref<1x8x32xf32, #tpu.memory_space<vmem>>, vector<1x8x32xf32>
    %3 = vector.shape_cast %2 : vector<1x8x32xf32> to vector<8x32xf32>
    %c0_2 = arith.constant 0 : index
    %4 = arith.index_cast %1 : i32 to index
    %c0_3 = arith.constant 0 : index
    %5 = vector.load %arg2[%c0_2, %4, %c0_3] : memref<1x8x32xf32, #tpu.memory_space<vmem>>, vector<1x8x32xf32>
    %6 = vector.shape_cast %5 : vector<1x8x32xf32> to vector<8x32xf32>
    %c0_4 = arith.constant 0 : index
    %c0_5 = arith.constant 0 : index
    %7 = vector.load %arg3[%c0_4, %c0_5] : memref<32x32xf32, #tpu.memory_space<vmem>>, vector<32x32xf32>
    %cst = arith.constant dense<0.000000e+00> : vector<8x32xf32>
    %8 = tpu.matmul %3, %7, %cst {dimension_numbers = #tpu.dot_dimension_numbers<[1], [0], [0], [1], [0, 0, 1, 1], [], []>} : vector<8x32xf32>, vector<32x32xf32>, vector<8x32xf32> -> vector<8x32xf32>
    %cst_6 = arith.constant dense<0.000000e+00> : vector<8x32xf32>
    %9 = tpu.matmul %6, %7, %cst_6 {dimension_numbers = #tpu.dot_dimension_numbers<[1], [0], [0], [1], [0, 0, 1, 1], [], []>} : vector<8x32xf32>, vector<32x32xf32>, vector<8x32xf32> -> vector<8x32xf32>
    %c0_7 = arith.constant 0 : index
    %c0_8 = arith.constant 0 : index
    %10 = vector.load %arg4[%c0_7, %c0_8] : memref<32x32xf32, #tpu.memory_space<vmem>>, vector<32x32xf32>
    %cst_9 = arith.constant dense<0.000000e+00> : vector<8x32xf32>
    %11 = tpu.matmul %3, %10, %cst_9 {dimension_numbers = #tpu.dot_dimension_numbers<[1], [0], [0], [1], [0, 0, 1, 1], [], []>} : vector<8x32xf32>, vector<32x32xf32>, vector<8x32xf32> -> vector<8x32xf32>
    %12 = vector.extract_strided_slice %8 {offsets = [0, 0], sizes = [8, 8], strides = [1, 1]} : vector<8x32xf32> to vector<8x8xf32>
    %13 = vector.extract_strided_slice %9 {offsets = [0, 0], sizes = [8, 8], strides = [1, 1]} : vector<8x32xf32> to vector<8x8xf32>
    %14 = arith.mulf %12, %12 : vector<8x8xf32>
    %cst_10 = arith.constant dense<0.000000e+00> : vector<8xf32>
    %15 = vector.multi_reduction <add>, %14, %cst_10 [1] : vector<8x8xf32> to vector<8xf32>
    %16 = vector.shape_cast %15 : vector<8xf32> to vector<8x1xf32>
    %17 = arith.mulf %13, %13 : vector<8x8xf32>
    %cst_11 = arith.constant dense<0.000000e+00> : vector<8xf32>
    %18 = vector.multi_reduction <add>, %17, %cst_11 [1] : vector<8x8xf32> to vector<8xf32>
    %19 = vector.shape_cast %18 : vector<8xf32> to vector<8x1xf32>
    %cst_12 = arith.constant dense<0.000000e+00> : vector<8x8xf32>
    %20 = tpu.matmul %13, %12, %cst_12 {dimension_numbers = #tpu.dot_dimension_numbers<[1], [1], [0], [0], [0, 0, 1, 0], [], []>} : vector<8x8xf32>, vector<8x8xf32>, vector<8x8xf32> -> vector<8x8xf32>
    %21 = tpu.transpose %16, [1, 0] : vector<8x1xf32> -> vector<1x8xf32>
    %22 = vector.broadcast %19 : vector<8x1xf32> to vector<8x8xf32>
    %23 = vector.broadcast %21 : vector<1x8xf32> to vector<8x8xf32>
    %24 = arith.addf %22, %23 : vector<8x8xf32>
    %cst_13 = arith.constant 2.000000e+00 : f32
    %25 = vector.broadcast %cst_13 : f32 to vector<8x8xf32>
    %26 = arith.mulf %25, %20 : vector<8x8xf32>
    %27 = arith.subf %24, %26 : vector<8x8xf32>
    %cst_14 = arith.constant 0.000000e+00 : f32
    %28 = vector.broadcast %cst_14 : f32 to vector<8x8xf32>
    %29 = arith.subf %28, %27 : vector<8x8xf32>
    %cst_15 = arith.constant 0.353553385 : f32
    %30 = vector.broadcast %cst_15 : f32 to vector<8x8xf32>
    %31 = arith.mulf %29, %30 : vector<8x8xf32>
    %cst_16 = arith.constant dense<0xFF800000> : vector<8xf32>
    %32 = vector.multi_reduction <maximumf>, %31, %cst_16 [1] : vector<8x8xf32> to vector<8xf32>
    %33 = vector.shape_cast %32 : vector<8xf32> to vector<8x1xf32>
    %34 = vector.broadcast %33 : vector<8x1xf32> to vector<8x8xf32>
    %35 = arith.subf %31, %34 : vector<8x8xf32>
    %36 = math.exp %35 : vector<8x8xf32>
    %cst_17 = arith.constant dense<0.000000e+00> : vector<8xf32>
    %37 = vector.multi_reduction <add>, %36, %cst_17 [1] : vector<8x8xf32> to vector<8xf32>
    %38 = vector.shape_cast %37 : vector<8xf32> to vector<8x1xf32>
    %39 = tpu.reciprocal %38 {approx = true} : vector<8x1xf32> -> vector<8x1xf32>
    %40 = vector.broadcast %39 : vector<8x1xf32> to vector<8x8xf32>
    %41 = arith.mulf %36, %40 : vector<8x8xf32>
    %c0_18 = arith.constant 0 : index
    %c0_19 = arith.constant 0 : index
    %c0_20 = arith.constant 0 : index
    %c0_21 = arith.constant 0 : index
    %42 = vector.load %arg8[%c0_18, %c0_19, %c0_20, %c0_21] : memref<1x4x8x8xf32, #tpu.memory_space<vmem>>, vector<1x1x8x8xf32>
    %43 = vector.shape_cast %42 : vector<1x1x8x8xf32> to vector<8x8xf32>
    %44 = vector.shape_cast %41 : vector<8x8xf32> to vector<1x1x8x8xf32>
    tpu.vector_store %arg8[%c0_18, %c0_19, %c0_20, %c0_21], %44 {strides = array<i32>} : memref<1x4x8x8xf32, #tpu.memory_space<vmem>>, vector<1x1x8x8xf32>,
    %45 = vector.extract_strided_slice %11 {offsets = [0, 0], sizes = [8, 8], strides = [1, 1]} : vector<8x32xf32> to vector<8x8xf32>
    %cst_22 = arith.constant dense<0.000000e+00> : vector<8x8xf32>
    %46 = tpu.matmul %41, %45, %cst_22 {dimension_numbers = #tpu.dot_dimension_numbers<[1], [0], [0], [1], [0, 0, 1, 1], [], []>} : vector<8x8xf32>, vector<8x8xf32>, vector<8x8xf32> -> vector<8x8xf32>
    %c0_23 = arith.constant 0 : index
    %c0_24 = arith.constant 0 : index
    %47 = vector.load %arg9[%c0_23, %c0_24] : memref<8x32xf32, #tpu.memory_space<vmem>>, vector<8x8xf32>
    tpu.vector_store %arg9[%c0_23, %c0_24], %46 {strides = array<i32>} : memref<8x32xf32, #tpu.memory_space<vmem>>, vector<8x8xf32>,
    %48 = vector.extract_strided_slice %8 {offsets = [0, 8], sizes = [8, 8], strides = [1, 1]} : vector<8x32xf32> to vector<8x8xf32>
    %49 = vector.extract_strided_slice %9 {offsets = [0, 8], sizes = [8, 8], strides = [1, 1]} : vector<8x32xf32> to vector<8x8xf32>
    %50 = arith.mulf %48, %48 : vector<8x8xf32>
    %cst_25 = arith.constant dense<0.000000e+00> : vector<8xf32>
    %51 = vector.multi_reduction <add>, %50, %cst_25 [1] : vector<8x8xf32> to vector<8xf32>
    %52 = vector.shape_cast %51 : vector<8xf32> to vector<8x1xf32>
    %53 = arith.mulf %49, %49 : vector<8x8xf32>
    %cst_26 = arith.constant dense<0.000000e+00> : vector<8xf32>
    %54 = vector.multi_reduction <add>, %53, %cst_26 [1] : vector<8x8xf32> to vector<8xf32>
    %55 = vector.shape_cast %54 : vector<8xf32> to vector<8x1xf32>
    %cst_27 = arith.constant dense<0.000000e+00> : vector<8x8xf32>
    %56 = tpu.matmul %49, %48, %cst_27 {dimension_numbers = #tpu.dot_dimension_numbers<[1], [1], [0], [0], [0, 0, 1, 0], [], []>} : vector<8x8xf32>, vector<8x8xf32>, vector<8x8xf32> -> vector<8x8xf32>
    %57 = tpu.transpose %52, [1, 0] : vector<8x1xf32> -> vector<1x8xf32>
    %58 = vector.broadcast %55 : vector<8x1xf32> to vector<8x8xf32>
    %59 = vector.broadcast %57 : vector<1x8xf32> to vector<8x8xf32>
    %60 = arith.addf %58, %59 : vector<8x8xf32>
    %cst_28 = arith.constant 2.000000e+00 : f32
    %61 = vector.broadcast %cst_28 : f32 to vector<8x8xf32>
    %62 = arith.mulf %61, %56 : vector<8x8xf32>
    %63 = arith.subf %60, %62 : vector<8x8xf32>
    %cst_29 = arith.constant 0.000000e+00 : f32
    %64 = vector.broadcast %cst_29 : f32 to vector<8x8xf32>
    %65 = arith.subf %64, %63 : vector<8x8xf32>
    %cst_30 = arith.constant 0.353553385 : f32
    %66 = vector.broadcast %cst_30 : f32 to vector<8x8xf32>
    %67 = arith.mulf %65, %66 : vector<8x8xf32>
    %cst_31 = arith.constant dense<0xFF800000> : vector<8xf32>
    %68 = vector.multi_reduction <maximumf>, %67, %cst_31 [1] : vector<8x8xf32> to vector<8xf32>
    %69 = vector.shape_cast %68 : vector<8xf32> to vector<8x1xf32>
    %70 = vector.broadcast %69 : vector<8x1xf32> to vector<8x8xf32>
    %71 = arith.subf %67, %70 : vector<8x8xf32>
    %72 = math.exp %71 : vector<8x8xf32>
    %cst_32 = arith.constant dense<0.000000e+00> : vector<8xf32>
    %73 = vector.multi_reduction <add>, %72, %cst_32 [1] : vector<8x8xf32> to vector<8xf32>
    %74 = vector.shape_cast %73 : vector<8xf32> to vector<8x1xf32>
    %75 = tpu.reciprocal %74 {approx = true} : vector<8x1xf32> -> vector<8x1xf32>
    %76 = vector.broadcast %75 : vector<8x1xf32> to vector<8x8xf32>
    %77 = arith.mulf %72, %76 : vector<8x8xf32>
    %c0_33 = arith.constant 0 : index
    %c1 = arith.constant 1 : index
    %c0_34 = arith.constant 0 : index
    %c0_35 = arith.constant 0 : index
    %78 = vector.load %arg8[%c0_33, %c1, %c0_34, %c0_35] : memref<1x4x8x8xf32, #tpu.memory_space<vmem>>, vector<1x1x8x8xf32>
    %79 = vector.shape_cast %78 : vector<1x1x8x8xf32> to vector<8x8xf32>
    %80 = vector.shape_cast %77 : vector<8x8xf32> to vector<1x1x8x8xf32>
    tpu.vector_store %arg8[%c0_33, %c1, %c0_34, %c0_35], %80 {strides = array<i32>} : memref<1x4x8x8xf32, #tpu.memory_space<vmem>>, vector<1x1x8x8xf32>,
    %81 = vector.extract_strided_slice %11 {offsets = [0, 8], sizes = [8, 8], strides = [1, 1]} : vector<8x32xf32> to vector<8x8xf32>
    %cst_36 = arith.constant dense<0.000000e+00> : vector<8x8xf32>
    %82 = tpu.matmul %77, %81, %cst_36 {dimension_numbers = #tpu.dot_dimension_numbers<[1], [0], [0], [1], [0, 0, 1, 1], [], []>} : vector<8x8xf32>, vector<8x8xf32>, vector<8x8xf32> -> vector<8x8xf32>
    %c0_37 = arith.constant 0 : index
    %c8 = arith.constant 8 : index
    %83 = vector.load %arg9[%c0_37, %c8] : memref<8x32xf32, #tpu.memory_space<vmem>>, vector<8x8xf32>
    tpu.vector_store %arg9[%c0_37, %c8], %82 {strides = array<i32>} : memref<8x32xf32, #tpu.memory_space<vmem>>, vector<8x8xf32>,
    %84 = vector.extract_strided_slice %8 {offsets = [0, 16], sizes = [8, 8], strides = [1, 1]} : vector<8x32xf32> to vector<8x8xf32>
    %85 = vector.extract_strided_slice %9 {offsets = [0, 16], sizes = [8, 8], strides = [1, 1]} : vector<8x32xf32> to vector<8x8xf32>
    %86 = arith.mulf %84, %84 : vector<8x8xf32>
    %cst_38 = arith.constant dense<0.000000e+00> : vector<8xf32>
    %87 = vector.multi_reduction <add>, %86, %cst_38 [1] : vector<8x8xf32> to vector<8xf32>
    %88 = vector.shape_cast %87 : vector<8xf32> to vector<8x1xf32>
    %89 = arith.mulf %85, %85 : vector<8x8xf32>
    %cst_39 = arith.constant dense<0.000000e+00> : vector<8xf32>
    %90 = vector.multi_reduction <add>, %89, %cst_39 [1] : vector<8x8xf32> to vector<8xf32>
    %91 = vector.shape_cast %90 : vector<8xf32> to vector<8x1xf32>
    %cst_40 = arith.constant dense<0.000000e+00> : vector<8x8xf32>
    %92 = tpu.matmul %85, %84, %cst_40 {dimension_numbers = #tpu.dot_dimension_numbers<[1], [1], [0], [0], [0, 0, 1, 0], [], []>} : vector<8x8xf32>, vector<8x8xf32>, vector<8x8xf32> -> vector<8x8xf32>
    %93 = tpu.transpose %88, [1, 0] : vector<8x1xf32> -> vector<1x8xf32>
    %94 = vector.broadcast %91 : vector<8x1xf32> to vector<8x8xf32>
    %95 = vector.broadcast %93 : vector<1x8xf32> to vector<8x8xf32>
    %96 = arith.addf %94, %95 : vector<8x8xf32>
    %cst_41 = arith.constant 2.000000e+00 : f32
    %97 = vector.broadcast %cst_41 : f32 to vector<8x8xf32>
    %98 = arith.mulf %97, %92 : vector<8x8xf32>
    %99 = arith.subf %96, %98 : vector<8x8xf32>
    %cst_42 = arith.constant 0.000000e+00 : f32
    %100 = vector.broadcast %cst_42 : f32 to vector<8x8xf32>
    %101 = arith.subf %100, %99 : vector<8x8xf32>
    %cst_43 = arith.constant 0.353553385 : f32
    %102 = vector.broadcast %cst_43 : f32 to vector<8x8xf32>
    %103 = arith.mulf %101, %102 : vector<8x8xf32>
    %cst_44 = arith.constant dense<0xFF800000> : vector<8xf32>
    %104 = vector.multi_reduction <maximumf>, %103, %cst_44 [1] : vector<8x8xf32> to vector<8xf32>
    %105 = vector.shape_cast %104 : vector<8xf32> to vector<8x1xf32>
    %106 = vector.broadcast %105 : vector<8x1xf32> to vector<8x8xf32>
    %107 = arith.subf %103, %106 : vector<8x8xf32>
    %108 = math.exp %107 : vector<8x8xf32>
    %cst_45 = arith.constant dense<0.000000e+00> : vector<8xf32>
    %109 = vector.multi_reduction <add>, %108, %cst_45 [1] : vector<8x8xf32> to vector<8xf32>
    %110 = vector.shape_cast %109 : vector<8xf32> to vector<8x1xf32>
    %111 = tpu.reciprocal %110 {approx = true} : vector<8x1xf32> -> vector<8x1xf32>
    %112 = vector.broadcast %111 : vector<8x1xf32> to vector<8x8xf32>
    %113 = arith.mulf %108, %112 : vector<8x8xf32>
    %c0_46 = arith.constant 0 : index
    %c2 = arith.constant 2 : index
    %c0_47 = arith.constant 0 : index
    %c0_48 = arith.constant 0 : index
    %114 = vector.load %arg8[%c0_46, %c2, %c0_47, %c0_48] : memref<1x4x8x8xf32, #tpu.memory_space<vmem>>, vector<1x1x8x8xf32>
    %115 = vector.shape_cast %114 : vector<1x1x8x8xf32> to vector<8x8xf32>
    %116 = vector.shape_cast %113 : vector<8x8xf32> to vector<1x1x8x8xf32>
    tpu.vector_store %arg8[%c0_46, %c2, %c0_47, %c0_48], %116 {strides = array<i32>} : memref<1x4x8x8xf32, #tpu.memory_space<vmem>>, vector<1x1x8x8xf32>,
    %117 = vector.extract_strided_slice %11 {offsets = [0, 16], sizes = [8, 8], strides = [1, 1]} : vector<8x32xf32> to vector<8x8xf32>
    %cst_49 = arith.constant dense<0.000000e+00> : vector<8x8xf32>
    %118 = tpu.matmul %113, %117, %cst_49 {dimension_numbers = #tpu.dot_dimension_numbers<[1], [0], [0], [1], [0, 0, 1, 1], [], []>} : vector<8x8xf32>, vector<8x8xf32>, vector<8x8xf32> -> vector<8x8xf32>
    %c0_50 = arith.constant 0 : index
    %c16 = arith.constant 16 : index
    %119 = vector.load %arg9[%c0_50, %c16] : memref<8x32xf32, #tpu.memory_space<vmem>>, vector<8x8xf32>
    tpu.vector_store %arg9[%c0_50, %c16], %118 {strides = array<i32>} : memref<8x32xf32, #tpu.memory_space<vmem>>, vector<8x8xf32>,
    %120 = vector.extract_strided_slice %8 {offsets = [0, 24], sizes = [8, 8], strides = [1, 1]} : vector<8x32xf32> to vector<8x8xf32>
    %121 = vector.extract_strided_slice %9 {offsets = [0, 24], sizes = [8, 8], strides = [1, 1]} : vector<8x32xf32> to vector<8x8xf32>
    %122 = arith.mulf %120, %120 : vector<8x8xf32>
    %cst_51 = arith.constant dense<0.000000e+00> : vector<8xf32>
    %123 = vector.multi_reduction <add>, %122, %cst_51 [1] : vector<8x8xf32> to vector<8xf32>
    %124 = vector.shape_cast %123 : vector<8xf32> to vector<8x1xf32>
    %125 = arith.mulf %121, %121 : vector<8x8xf32>
    %cst_52 = arith.constant dense<0.000000e+00> : vector<8xf32>
    %126 = vector.multi_reduction <add>, %125, %cst_52 [1] : vector<8x8xf32> to vector<8xf32>
    %127 = vector.shape_cast %126 : vector<8xf32> to vector<8x1xf32>
    %cst_53 = arith.constant dense<0.000000e+00> : vector<8x8xf32>
    %128 = tpu.matmul %121, %120, %cst_53 {dimension_numbers = #tpu.dot_dimension_numbers<[1], [1], [0], [0], [0, 0, 1, 0], [], []>} : vector<8x8xf32>, vector<8x8xf32>, vector<8x8xf32> -> vector<8x8xf32>
    %129 = tpu.transpose %124, [1, 0] : vector<8x1xf32> -> vector<1x8xf32>
    %130 = vector.broadcast %127 : vector<8x1xf32> to vector<8x8xf32>
    %131 = vector.broadcast %129 : vector<1x8xf32> to vector<8x8xf32>
    %132 = arith.addf %130, %131 : vector<8x8xf32>
    %cst_54 = arith.constant 2.000000e+00 : f32
    %133 = vector.broadcast %cst_54 : f32 to vector<8x8xf32>
    %134 = arith.mulf %133, %128 : vector<8x8xf32>
    %135 = arith.subf %132, %134 : vector<8x8xf32>
    %cst_55 = arith.constant 0.000000e+00 : f32
    %136 = vector.broadcast %cst_55 : f32 to vector<8x8xf32>
    %137 = arith.subf %136, %135 : vector<8x8xf32>
    %cst_56 = arith.constant 0.353553385 : f32
    %138 = vector.broadcast %cst_56 : f32 to vector<8x8xf32>
    %139 = arith.mulf %137, %138 : vector<8x8xf32>
    %cst_57 = arith.constant dense<0xFF800000> : vector<8xf32>
    %140 = vector.multi_reduction <maximumf>, %139, %cst_57 [1] : vector<8x8xf32> to vector<8xf32>
    %141 = vector.shape_cast %140 : vector<8xf32> to vector<8x1xf32>
    %142 = vector.broadcast %141 : vector<8x1xf32> to vector<8x8xf32>
    %143 = arith.subf %139, %142 : vector<8x8xf32>
    %144 = math.exp %143 : vector<8x8xf32>
    %cst_58 = arith.constant dense<0.000000e+00> : vector<8xf32>
    %145 = vector.multi_reduction <add>, %144, %cst_58 [1] : vector<8x8xf32> to vector<8xf32>
    %146 = vector.shape_cast %145 : vector<8xf32> to vector<8x1xf32>
    %147 = tpu.reciprocal %146 {approx = true} : vector<8x1xf32> -> vector<8x1xf32>
    %148 = vector.broadcast %147 : vector<8x1xf32> to vector<8x8xf32>
    %149 = arith.mulf %144, %148 : vector<8x8xf32>
    %c0_59 = arith.constant 0 : index
    %c3 = arith.constant 3 : index
    %c0_60 = arith.constant 0 : index
    %c0_61 = arith.constant 0 : index
    %150 = vector.load %arg8[%c0_59, %c3, %c0_60, %c0_61] : memref<1x4x8x8xf32, #tpu.memory_space<vmem>>, vector<1x1x8x8xf32>
    %151 = vector.shape_cast %150 : vector<1x1x8x8xf32> to vector<8x8xf32>
    %152 = vector.shape_cast %149 : vector<8x8xf32> to vector<1x1x8x8xf32>
    tpu.vector_store %arg8[%c0_59, %c3, %c0_60, %c0_61], %152 {strides = array<i32>} : memref<1x4x8x8xf32, #tpu.memory_space<vmem>>, vector<1x1x8x8xf32>,
    %153 = vector.extract_strided_slice %11 {offsets = [0, 24], sizes = [8, 8], strides = [1, 1]} : vector<8x32xf32> to vector<8x8xf32>
    %cst_62 = arith.constant dense<0.000000e+00> : vector<8x8xf32>
    %154 = tpu.matmul %149, %153, %cst_62 {dimension_numbers = #tpu.dot_dimension_numbers<[1], [0], [0], [1], [0, 0, 1, 1], [], []>} : vector<8x8xf32>, vector<8x8xf32>, vector<8x8xf32> -> vector<8x8xf32>
    %c0_63 = arith.constant 0 : index
    %c24 = arith.constant 24 : index
    %155 = vector.load %arg9[%c0_63, %c24] : memref<8x32xf32, #tpu.memory_space<vmem>>, vector<8x8xf32>
    tpu.vector_store %arg9[%c0_63, %c24], %154 {strides = array<i32>} : memref<8x32xf32, #tpu.memory_space<vmem>>, vector<8x8xf32>,
    %c0_64 = arith.constant 0 : index
    %c0_65 = arith.constant 0 : index
    %156 = vector.load %arg9[%c0_64, %c0_65] : memref<8x32xf32, #tpu.memory_space<vmem>>, vector<8x32xf32>
    %c0_66 = arith.constant 0 : index
    %c0_67 = arith.constant 0 : index
    %157 = vector.load %arg5[%c0_66, %c0_67] : memref<32x32xf32, #tpu.memory_space<vmem>>, vector<32x32xf32>
    %cst_68 = arith.constant dense<0.000000e+00> : vector<8x32xf32>
    %158 = tpu.matmul %156, %157, %cst_68 {dimension_numbers = #tpu.dot_dimension_numbers<[1], [0], [0], [1], [0, 0, 1, 1], [], []>} : vector<8x32xf32>, vector<32x32xf32>, vector<8x32xf32> -> vector<8x32xf32>
    %c0_69 = arith.constant 0 : index
    %c0_70 = arith.constant 0 : index
    %159 = vector.load %arg6[%c0_69, %c0_70] : memref<1x32xf32, #tpu.memory_space<vmem>>, vector<1x32xf32>
    %160 = vector.broadcast %159 : vector<1x32xf32> to vector<8x32xf32>
    %161 = arith.addf %158, %160 : vector<8x32xf32>
    %c0_71 = arith.constant 0 : index
    %c0_72 = arith.constant 0 : index
    %c0_73 = arith.constant 0 : index
    %162 = vector.load %arg7[%c0_71, %c0_72, %c0_73] : memref<1x8x32xf32, #tpu.memory_space<vmem>>, vector<1x8x32xf32>
    %163 = vector.shape_cast %162 : vector<1x8x32xf32> to vector<8x32xf32>
    %164 = vector.shape_cast %161 : vector<8x32xf32> to vector<1x8x32xf32>
    tpu.vector_store %arg7[%c0_71, %c0_72, %c0_73], %164 {strides = array<i32>} : memref<1x8x32xf32, #tpu.memory_space<vmem>>, vector<1x8x32xf32>,
    return
  }
  func.func @transform_0(%arg0: i32, %arg1: i32) -> (i32, i32, i32) {
    %c0_i32 = arith.constant 0 : i32
    %c0_i32_0 = arith.constant 0 : i32
    %c0_i32_1 = arith.constant 0 : i32
    return %arg0, %c0_i32, %c0_i32_0 : i32, i32, i32
  }
  func.func @transform_1(%arg0: i32, %arg1: i32) -> (i32, i32) {
    %c0_i32 = arith.constant 0 : i32
    %c0_i32_0 = arith.constant 0 : i32
    %c0_i32_1 = arith.constant 0 : i32
    return %c0_i32, %c0_i32_0 : i32, i32
  }
  func.func @transform_2(%arg0: i32, %arg1: i32) -> (i32, i32) {
    %c0_i32 = arith.constant 0 : i32
    %c0_i32_0 = arith.constant 0 : i32
    %c0_i32_1 = arith.constant 0 : i32
    return %c0_i32, %c0_i32_0 : i32, i32
  }
  func.func @transform_3(%arg0: i32, %arg1: i32) -> (i32, i32) {
    %c0_i32 = arith.constant 0 : i32
    %c0_i32_0 = arith.constant 0 : i32
    %c0_i32_1 = arith.constant 0 : i32
    return %c0_i32, %c0_i32_0 : i32, i32
  }
  func.func @transform_4(%arg0: i32, %arg1: i32) -> (i32, i32) {
    %c0_i32 = arith.constant 0 : i32
    %c0_i32_0 = arith.constant 0 : i32
    %c0_i32_1 = arith.constant 0 : i32
    return %c0_i32, %c0_i32_0 : i32, i32
  }
  func.func @transform_5(%arg0: i32, %arg1: i32) -> (i32, i32, i32) {
    %c0_i32 = arith.constant 0 : i32
    %c0_i32_0 = arith.constant 0 : i32
    return %arg0, %arg1, %c0_i32 : i32, i32, i32
  }
  func.func @transform_6(%arg0: i32, %arg1: i32) -> (i32, i32, i32, i32) {
    %c0_i32 = arith.constant 0 : i32
    %c0_i32_0 = arith.constant 0 : i32
    %c0_i32_1 = arith.constant 0 : i32
    return %arg0, %c0_i32, %arg1, %c0_i32_0 : i32, i32, i32, i32
  }
}

</mosaic_0001>

<llo_original>
// kernel: tpu_custom_call.1
$region0: #{tpu_custom_call.1}
  #allocation0 [shape = 'u32[]', space=smem, size = 0x4, offset = 0x4, fixed_abs, tag = 'smem constant byte address 0x4 - core index']
  #allocation1 [shape = 'u32[72,128]{1,0:T(1,128)}', space=vmem, size = 0x9000, scoped, tag = 'internal scratch']
  #allocation2 [shape = 'f32[8,32]{1,0:T(8,128)}', space=vmem, size = 0x1000, scoped, tag = 'scratch operand']
  %s0 = inlined_call_operand.hbm [shape: f32[2,8,32], index: 0, kind: input, shape index: {}]
  %s1 = inlined_call_operand.hbm [shape: f32[32,32], index: 1, kind: input, shape index: {}]
  %s2 = inlined_call_operand.hbm [shape: f32[32,32], index: 2, kind: input, shape index: {}]
  %s3 = inlined_call_operand.hbm [shape: f32[32,32], index: 3, kind: input, shape index: {}]
  %s4 = inlined_call_operand.vmem [shape: f32[1,32], index: 4, kind: input, shape index: {}]
  %s5 = inlined_call_operand.hbm [shape: f32[2,8,32], index: 5, kind: output, shape index: {0}]
  %s6 = inlined_call_operand.hbm [shape: f32[2,4,8,8], index: 6, kind: output, shape index: {1}]
  %7 = xla_tuple %s5, %s6
  %s8 = sld [smem:[#allocation0]]
  $region77: #{tpu_custom_call.1} parent=0
    _
  %s10 = ssub.s32 1, %s8
  %s11 = scalar_select 0, %s10, %s8
  $region1: #{tpu_custom_call.1} parent=0
    #allocation3 [shape = 'u8[8192]{0}', space=vmem, size = 0x2000, scoped, tag = 'input window, operand 0']
    #allocation4 [shape = 's32[2]{0}', space=sflag, size = 0x8, scoped, tag = 'scoped memory for tpu_custom_call.1']
    #allocation5 [shape = 's32[2]{0}', space=sflag, size = 0x8, scoped, tag = 'scoped memory for tpu_custom_call.1']
    #allocation6 [shape = 'u8[16384]{0}', space=vmem, size = 0x4000, scoped, tag = 'input window, operand 1, single buffered']
    #allocation7 [shape = 's32[1]{0}', space=sflag, size = 0x4, scoped, tag = 'scoped memory for tpu_custom_call.1']
    #allocation8 [shape = 'u8[16384]{0}', space=vmem, size = 0x4000, scoped, tag = 'input window, operand 2, single buffered']
    #allocation9 [shape = 'u8[16384]{0}', space=vmem, size = 0x4000, scoped, tag = 'input window, operand 3, single buffered']
    #allocation10 [shape = 's32[1]{0}', space=sflag, size = 0x4, scoped, tag = 'scoped memory for tpu_custom_call.1']
    #allocation11 [shape = 'u8[8192]{0}', space=vmem, size = 0x2000, scoped, tag = 'output window, operand 0']
    #allocation12 [shape = 'u8[32768]{0}', space=vmem, size = 0x8000, scoped, tag = 'output window, operand 1']
    #allocation13 [shape = 's32[2]{0}', space=sflag, size = 0x8, scoped, tag = 'scoped memory for tpu_custom_call.1']
    %12 = vsyncpa [#allocation4], 0
    %s13 = scalar_lea.sflag [#allocation4], 1
    %14 = vsyncpa %s13, 0
    %15 = vsyncpa [#allocation7], 0
    %16 = vsyncpa [#allocation10], 0
    %17 = vsyncpa [#allocation5], 0
    %s18 = scalar_lea.sflag [#allocation5], 1
    %19 = vsyncpa %s18, 0
    %20 = vsyncpa [#allocation13], 0
    %s21 = scalar_lea.sflag [#allocation13], 1
    %22 = vsyncpa %s21, 0
    loop: start=0, step=1, limit=4
    $region2: #{tpu_custom_call.1} parent=1 // loop_pre_header
      _
    $region3: #{tpu_custom_call.1} parent=1 // loop_header
      %s24 = sphi 0, %s28
      %p25 = scmp.ge.s32.totalorder %s24, 4
      %s31 = sphi 0, %s43
      %s32 = sphi 0, %s39
      %s33 = sphi 0, %s31
      %s34 = sphi 0, %s32
      %s35 = sphi 0, %s33
      %s36 = sphi 0, %s34
      %s46 = sphi 0, %s48
      %s49 = sphi 0, %s46
      %s50 = sphi 0, %s49
      %s66 = sphi 0, %s50
      %s70 = sphi 0, %s70
      %s72 = sphi 0, %s70
      %s73 = sphi 0, %s72
      %s87 = sphi 0, %s73
      %s91 = sphi 0, %s91
      %s93 = sphi 0, %s91
      %s94 = sphi 0, %s93
      %s108 = sphi 0, %s94
      %s112 = sphi 0, %s112
      %s114 = sphi 0, %s112
      %s115 = sphi 0, %s114
      %s129 = sphi 0, %s115
      %s133 = sphi 0, %s133
      %s135 = sphi 0, %s133
      %s136 = sphi 0, %s135
      %s150 = sphi 0, %s136
      %s158 = sphi 0, %s160
      %s161 = sphi 0, %s158
      %s162 = sphi 0, %s161
      %s178 = sphi 0, %s162
      %s186 = sphi 0, %s188
      %s189 = sphi 0, %s186
      %s190 = sphi 0, %s189
      %s206 = sphi 0, %s190
    $region4: #{tpu_custom_call.1} parent=1 // loop_header_branch
      %27 = sbr.rel (%p25) target = $region8
    $region5: #{tpu_custom_call.1} parent=1 // loop_body
      %s29 = ssub.s32 %s24, 1
      %s30 = ssub.s32 %s24, 2
      %s37 = sadd.s32 1, %s32
      %p38 = scmp.ge.s32.totalorder %s37, 1
      %s39 = scalar_select %p38, 0, %s37
      %s40 = sadd.s32 1, %s31
      %s41 = scalar_select %p38, %s40, %s31
      %p42 = scmp.ge.s32.totalorder %s41, 2
      %s43 = scalar_select %p42, 0, %s41
      %s44 = ssub.s32 %s31, %s43
      %p45 = scmp.eq.s32.totalorder %s44, 0
      %s47 = sadd.s32 %s46, 1
      %s48 = scalar_select %p45, %s46, %s47
      %p51 = pneg %p45
      %p52 = scmp.eq.s32.totalorder %s24, 1
      %p53 = por %p51, %p52
      %p54 = scmp.ne.s32.totalorder %s46, %s49
      %p55 = scmp.eq.s32.totalorder %s24, 0
      %p56 = por %p54, %p55
      %p57 = scmp.ne.s32.totalorder %s46, %s49
      %p58 = scmp.eq.s32.totalorder %s29, 1
      %p59 = por %p57, %p58
      %p60 = scmp.ne.s32.totalorder %s49, %s50
      %p61 = scmp.eq.s32.totalorder %s29, 0
      %p62 = por %p60, %p61
      %p63 = scmp.ne.s32.totalorder %s49, %s50
      %p64 = scmp.eq.s32.totalorder %s30, 1
      %p65 = por %p63, %p64
      %p67 = scmp.ne.s32.totalorder %s50, %s66
      %p68 = scmp.eq.s32.totalorder %s30, 0
      %p69 = por %p67, %p68
      %s71 = sadd.s32 %s70, 1
      %p74 = scmp.eq.s32.totalorder %s24, 1
      %p75 = scmp.ne.s32.totalorder %s70, %s72
      %p76 = scmp.eq.s32.totalorder %s24, 0
      %p77 = por %p75, %p76
      %p78 = scmp.ne.s32.totalorder %s70, %s72
      %p79 = scmp.eq.s32.totalorder %s29, 1
      %p80 = por %p78, %p79
      %p81 = scmp.ne.s32.totalorder %s72, %s73
      %p82 = scmp.eq.s32.totalorder %s29, 0
      %p83 = por %p81, %p82
      %p84 = scmp.ne.s32.totalorder %s72, %s73
      %p85 = scmp.eq.s32.totalorder %s30, 1
      %p86 = por %p84, %p85
      %p88 = scmp.ne.s32.totalorder %s73, %s87
      %p89 = scmp.eq.s32.totalorder %s30, 0
      %p90 = por %p88, %p89
      %s92 = sadd.s32 %s91, 1
      %p95 = scmp.eq.s32.totalorder %s24, 1
      %p96 = scmp.ne.s32.totalorder %s91, %s93
      %p97 = scmp.eq.s32.totalorder %s24, 0
      %p98 = por %p96, %p97
      %p99 = scmp.ne.s32.totalorder %s91, %s93
      %p100 = scmp.eq.s32.totalorder %s29, 1
      %p101 = por %p99, %p100
      %p102 = scmp.ne.s32.totalorder %s93, %s94
      %p103 = scmp.eq.s32.totalorder %s29, 0
      %p104 = por %p102, %p103
      %p105 = scmp.ne.s32.totalorder %s93, %s94
      %p106 = scmp.eq.s32.totalorder %s30, 1
      %p107 = por %p105, %p106
      %p109 = scmp.ne.s32.totalorder %s94, %s108
      %p110 = scmp.eq.s32.totalorder %s30, 0
      %p111 = por %p109, %p110
      %s113 = sadd.s32 %s112, 1
      %p116 = scmp.eq.s32.totalorder %s24, 1
      %p117 = scmp.ne.s32.totalorder %s112, %s114
      %p118 = scmp.eq.s32.totalorder %s24, 0
      %p119 = por %p117, %p118
      %p120 = scmp.ne.s32.totalorder %s112, %s114
      %p121 = scmp.eq.s32.totalorder %s29, 1
      %p122 = por %p120, %p121
      %p123 = scmp.ne.s32.totalorder %s114, %s115
      %p124 = scmp.eq.s32.totalorder %s29, 0
      %p125 = por %p123, %p124
      %p126 = scmp.ne.s32.totalorder %s114, %s115
      %p127 = scmp.eq.s32.totalorder %s30, 1
      %p128 = por %p126, %p127
      %p130 = scmp.ne.s32.totalorder %s115, %s129
      %p131 = scmp.eq.s32.totalorder %s30, 0
      %p132 = por %p130, %p131
      %s134 = sadd.s32 %s133, 1
      %p137 = scmp.eq.s32.totalorder %s24, 1
      %p138 = scmp.ne.s32.totalorder %s133, %s135
      %p139 = scmp.eq.s32.totalorder %s24, 0
      %p140 = por %p138, %p139
      %p141 = scmp.ne.s32.totalorder %s133, %s135
      %p142 = scmp.eq.s32.totalorder %s29, 1
      %p143 = por %p141, %p142
      %p144 = scmp.ne.s32.totalorder %s135, %s136
      %p145 = scmp.eq.s32.totalorder %s29, 0
      %p146 = por %p144, %p145
      %p147 = scmp.ne.s32.totalorder %s135, %s136
      %p148 = scmp.eq.s32.totalorder %s30, 1
      %p149 = por %p147, %p148
      %p151 = scmp.ne.s32.totalorder %s136, %s150
      %p152 = scmp.eq.s32.totalorder %s30, 0
      %p153 = por %p151, %p152
      %s154 = ssub.s32 %s31, %s43
      %s155 = ssub.s32 %s32, %s39
      %s156 = sor.u32 %s154, %s155
      %p157 = scmp.eq.s32.totalorder %s156, 0
      %s159 = sadd.s32 %s158, 1
      %s160 = scalar_select %p157, %s158, %s159
      %p163 = pneg %p157
      %p164 = scmp.eq.s32.totalorder %s24, 1
      %p165 = por %p163, %p164
      %p166 = scmp.ne.s32.totalorder %s158, %s161
      %p167 = scmp.eq.s32.totalorder %s24, 0
      %p168 = por %p166, %p167
      %p169 = scmp.ne.s32.totalorder %s158, %s161
      %p170 = scmp.eq.s32.totalorder %s29, 1
      %p171 = por %p169, %p170
      %p172 = scmp.ne.s32.totalorder %s161, %s162
      %p173 = scmp.eq.s32.totalorder %s29, 0
      %p174 = por %p172, %p173
      %p175 = scmp.ne.s32.totalorder %s161, %s162
      %p176 = scmp.eq.s32.totalorder %s30, 1
      %p177 = por %p175, %p176
      %p179 = scmp.ne.s32.totalorder %s162, %s178
      %p180 = scmp.eq.s32.totalorder %s30, 0
      %p181 = por %p179, %p180
      %s182 = ssub.s32 %s31, %s43
      %s183 = ssub.s32 %s32, %s39
      %s184 = sor.u32 %s182, %s183
      %p185 = scmp.eq.s32.totalorder %s184, 0
      %s187 = sadd.s32 %s186, 1
      %s188 = scalar_select %p185, %s186, %s187
      %p191 = pneg %p185
      %p192 = scmp.eq.s32.totalorder %s24, 1
      %p193 = por %p191, %p192
      %p194 = scmp.ne.s32.totalorder %s186, %s189
      %p195 = scmp.eq.s32.totalorder %s24, 0
      %p196 = por %p194, %p195
      %p197 = scmp.ne.s32.totalorder %s186, %s189
      %p198 = scmp.eq.s32.totalorder %s29, 1
      %p199 = por %p197, %p198
      %p200 = scmp.ne.s32.totalorder %s189, %s190
      %p201 = scmp.eq.s32.totalorder %s29, 0
      %p202 = por %p200, %p201
      %p203 = scmp.ne.s32.totalorder %s189, %s190
      %p204 = scmp.eq.s32.totalorder %s30, 1
      %p205 = por %p203, %p204
      %p207 = scmp.ne.s32.totalorder %s190, %s206
      %p208 = scmp.eq.s32.totalorder %s30, 0
      %p209 = por %p207, %p208
      %p210 = scmp.le.s32.totalorder 1, %s24
      %p211 = scmp.lt.s32.totalorder %s24, 3
      %p212 = pnand %p210, %p211
      %p213 = pneg %p212
      // Predicated region
      $region9: #{tpu_custom_call.1} parent=5 // pred_check
        _
      $region10: #{tpu_custom_call.1} parent=5 // pred_check_branch
        %215 = sbr.rel (%p212) target = $region12
      $region11: #{tpu_custom_call.1} parent=5 // pred_region
        %s216 = ssub.s32 %s24, 1
        // Predicated region
        $region13: #{tpu_custom_call.1} parent=11 // pred_check
          %p217 = pneg %p83
        $region14: #{tpu_custom_call.1} parent=11 // pred_check_branch
          %219 = sbr.rel (%p217) target = $region16
        $region15: #{tpu_custom_call.1} parent=11 // pred_region
          %221 = vsyncadd [#allocation7], 0
          %s222 = sshll.u32 %s1, 4
          %s223 = int_to_ptr.hbm [resolvable:$true] %s222
          %s224 = sshll.u32 [#allocation6], 4
          %s225 = int_to_ptr.vmem [resolvable:$true] %s224
          %230 = dma.hbm_to_vmem [thread:$0]  %s223, 512, %s225, [#allocation7], 128, 128, 8
        $region16: #{tpu_custom_call.1} parent=11 // pred_fallthru
          _
        // Predicated region
        $region17: #{tpu_custom_call.1} parent=11 // pred_check
          %p231 = pneg %p104
        $region18: #{tpu_custom_call.1} parent=11 // pred_check_branch
          %233 = sbr.rel (%p231) target = $region20
        $region19: #{tpu_custom_call.1} parent=11 // pred_region
          %235 = vsyncadd [#allocation7], 0
          %s236 = sshll.u32 %s2, 4
          %s237 = int_to_ptr.hbm [resolvable:$true] %s236
          %s238 = sshll.u32 [#allocation8], 4
          %s239 = int_to_ptr.vmem [resolvable:$true] %s238
          %244 = dma.hbm_to_vmem [thread:$0]  %s237, 512, %s239, [#allocation7], 128, 128, 8
        $region20: #{tpu_custom_call.1} parent=11 // pred_fallthru
          _
        // Predicated region
        $region21: #{tpu_custom_call.1} parent=11 // pred_check
          %p245 = pneg %p125
        $region22: #{tpu_custom_call.1} parent=11 // pred_check_branch
          %247 = sbr.rel (%p245) target = $region24
        $region23: #{tpu_custom_call.1} parent=11 // pred_region
          %249 = vsyncadd [#allocation10], 0
          %s250 = sshll.u32 %s3, 4
          %s251 = int_to_ptr.hbm [resolvable:$true] %s250
          %s252 = sshll.u32 [#allocation9], 4
          %s253 = int_to_ptr.vmem [resolvable:$true] %s252
          %258 = dma.hbm_to_vmem [thread:$0]  %s251, 512, %s253, [#allocation10], 128, 128, 8
        $region24: #{tpu_custom_call.1} parent=11 // pred_fallthru
          _
        // Predicated region
        $region25: #{tpu_custom_call.1} parent=11 // pred_check
          %p259 = pneg %p146
        $region26: #{tpu_custom_call.1} parent=11 // pred_check_branch
          %261 = sbr.rel (%p259) target = $region28
        $region27: #{tpu_custom_call.1} parent=11 // pred_region
          _
        $region28: #{tpu_custom_call.1} parent=11 // pred_fallthru
          _
      $region12: #{tpu_custom_call.1} parent=5 // pred_fallthru
        _
      %p262 = scmp.lt.s32.totalorder %s24, 2
      // Predicated region
      $region29: #{tpu_custom_call.1} parent=5 // pred_check
        %p263 = pneg %p262
      $region30: #{tpu_custom_call.1} parent=5 // pred_check_branch
        %265 = sbr.rel (%p263) target = $region32
      $region31: #{tpu_custom_call.1} parent=5 // pred_region
        // Predicated region
        $region33: #{tpu_custom_call.1} parent=31 // pred_check
          %p266 = pneg %p56
        $region34: #{tpu_custom_call.1} parent=31 // pred_check_branch
          %268 = sbr.rel (%p266) target = $region36
        $region35: #{tpu_custom_call.1} parent=31 // pred_region
          %s269 = sand.u32 %s46, 1
          %s270 = scalar_lea.sflag [#allocation4], %s269
          %s271 = sand.u32 %s46, 1
          %s272 = smul.addr %s271, 8
          %s273 = scalar_lea.vmem [#allocation3], %s272
          %275 = vsyncadd %s270, 0
          %s276 = smul.addr %s31, 8
          %s277 = scalar_lea.hbm %s0, %s276
          %s279 = sshll.u32 %s277, 4
          %s280 = int_to_ptr.hbm [resolvable:$true] %s279
          %s281 = sshll.u32 %s273, 4
          %s282 = int_to_ptr.vmem [resolvable:$true] %s281
          %284 = dma.hbm_to_vmem [thread:$0]  %s280, 128, %s282, %s270
        $region36: #{tpu_custom_call.1} parent=31 // pred_fallthru
          _
      $region32: #{tpu_custom_call.1} parent=5 // pred_fallthru
        _
      %p285 = scmp.le.s32.totalorder 1, %s24
      %p286 = scmp.lt.s32.totalorder %s24, 3
      %p287 = pnand %p285, %p286
      %p288 = pneg %p287
      // Predicated region
      $region37: #{tpu_custom_call.1} parent=5 // pred_check
        _
      $region38: #{tpu_custom_call.1} parent=5 // pred_check_branch
        %290 = sbr.rel (%p287) target = $region40
      $region39: #{tpu_custom_call.1} parent=5 // pred_region
        %s291 = ssub.s32 %s24, 1
        %s292 = sand.u32 %s49, 1
        %s293 = scalar_lea.sflag [#allocation4], %s292
        %s294 = sand.u32 %s49, 1
        %s295 = smul.addr %s294, 8
        %s296 = scalar_lea.vmem [#allocation3], %s295
        // Predicated region
        $region41: #{tpu_custom_call.1} parent=39 // pred_check
          %p297 = pneg %p62
        $region42: #{tpu_custom_call.1} parent=39 // pred_check_branch
          %299 = sbr.rel (%p297) target = $region44
        $region43: #{tpu_custom_call.1} parent=39 // pred_region
          %301 = dma.done %s293, 128
        $region44: #{tpu_custom_call.1} parent=39 // pred_fallthru
          _
        // Predicated region
        $region45: #{tpu_custom_call.1} parent=39 // pred_check
          %p302 = pneg %p83
        $region46: #{tpu_custom_call.1} parent=39 // pred_check_branch
          %304 = sbr.rel (%p302) target = $region48
        $region47: #{tpu_custom_call.1} parent=39 // pred_region
          %306 = dma.done [#allocation7], 512
        $region48: #{tpu_custom_call.1} parent=39 // pred_fallthru
          _
        // Predicated region
        $region49: #{tpu_custom_call.1} parent=39 // pred_check
          %p307 = pneg %p104
        $region50: #{tpu_custom_call.1} parent=39 // pred_check_branch
          %309 = sbr.rel (%p307) target = $region52
        $region51: #{tpu_custom_call.1} parent=39 // pred_region
          %311 = dma.done [#allocation7], 512
        $region52: #{tpu_custom_call.1} parent=39 // pred_fallthru
          _
        // Predicated region
        $region53: #{tpu_custom_call.1} parent=39 // pred_check
          %p312 = pneg %p125
        $region54: #{tpu_custom_call.1} parent=39 // pred_check_branch
          %314 = sbr.rel (%p312) target = $region56
        $region55: #{tpu_custom_call.1} parent=39 // pred_region
          %316 = dma.done [#allocation10], 512
        $region56: #{tpu_custom_call.1} parent=39 // pred_fallthru
          _
        %s317 = sand.u32 %s49, 1
        %s318 = scalar_lea.sflag [#allocation4], %s317
        %s319 = sand.u32 %s49, 1
        %s320 = smul.addr %s319, 8
        %s321 = scalar_lea.vmem [#allocation3], %s320
        %p322 = pneg %p62
        %p323 = pneg %p59
        %p324 = pneg %p83
        %p325 = pneg %p80
        %p326 = pneg %p104
        %p327 = pneg %p101
        %p328 = pneg %p125
        %p329 = pneg %p122
        %p330 = pneg %p146
        %p331 = pneg %p143
        %p332 = pneg %p174
        %p333 = pneg %p171
        %s334 = sand.u32 %s161, 1
        %s335 = scalar_lea.sflag [#allocation5], %s334
        %s336 = sand.u32 %s161, 1
        %s337 = smul.addr %s336, 8
        %s338 = scalar_lea.vmem [#allocation11], %s337
        %p339 = pneg %p202
        %p340 = pneg %p199
        %s341 = sand.u32 %s189, 1
        %s342 = scalar_lea.sflag [#allocation13], %s341
        %s343 = sand.u32 %s189, 1
        %s344 = smul.addr %s343, 32
        %s345 = scalar_lea.vmem [#allocation12], %s344
        %s346 = smul.u32 %s34, 8
        %v347 = vld [vmem:[%s296] sm:$0xff]
        %s348 = scalar_lea.vmem %s296, %s346 [#allocation3]
        %v349 = vld [vmem:[%s348] sm:$0xff]
        %v350 = vld [vmem:[#allocation6] sm:$0xff]
        %v351 = vld [vmem:[#allocation6 + $0x8] sm:$0xff]
        %v352 = vld [vmem:[#allocation6 + $0x10] sm:$0xff]
        %v353 = vld [vmem:[#allocation6 + $0x18] sm:$0xff]
        %vm354 = vcmask 261120
        %v356 = vsel %vm354, %v347, 0
        %358 = vmatpush.msra.mxu0 0.0
        %359 = vmatpush.msra.mxu0 0.0
        %360 = vmatpush.msra.mxu0 0.0
        %361 = vmatpush.msra.mxu0 0.0
        %362 = vmatpush.msra.mxu0 0.0
        %363 = vmatpush.msra.mxu0 0.0
        %364 = vmatpush.msra.mxu0 0.0
        %365 = vmatpush.msra.mxu0 0.0
        %366 = vmatpush.msra.mxu0 0.0
        %367 = vmatpush.msra.mxu0 0.0
        %368 = vmatpush.msra.mxu0 0.0
        %369 = vmatpush.msra.mxu0 0.0
        %370 = vmatpush.msra.mxu0 %v353
        %371 = vmatpush.msra.mxu0 %v352
        %372 = vmatpush.msra.mxu0 %v351
        %373 = vmatpush.msra.mxu0 %v350
        %374 = vmatmul.f32.gmra.mxu0 %v356
        %v375 = vpop.f32.mrf.mxu0
        %v376 = vadd.f32 0.0, %v375
        %377 = vdwg.mxu0
        %v379 = vsel %vm354, %v349, 0
        %381 = vmatpush.msra.mxu0 0.0
        %382 = vmatpush.msra.mxu0 0.0
        %383 = vmatpush.msra.mxu0 0.0
        %384 = vmatpush.msra.mxu0 0.0
        %385 = vmatpush.msra.mxu0 0.0
        %386 = vmatpush.msra.mxu0 0.0
        %387 = vmatpush.msra.mxu0 0.0
        %388 = vmatpush.msra.mxu0 0.0
        %389 = vmatpush.msra.mxu0 0.0
        %390 = vmatpush.msra.mxu0 0.0
        %391 = vmatpush.msra.mxu0 0.0
        %392 = vmatpush.msra.mxu0 0.0
        %393 = vmatpush.msra.mxu0 %v353
        %394 = vmatpush.msra.mxu0 %v352
        %395 = vmatpush.msra.mxu0 %v351
        %396 = vmatpush.msra.mxu0 %v350
        %397 = vmatmul.f32.gmra.mxu0 %v379
        %v398 = vpop.f32.mrf.mxu0
        %v399 = vadd.f32 0.0, %v398
        %400 = vdwg.mxu0
        %v401 = vld [vmem:[#allocation8] sm:$0xff]
        %v402 = vld [vmem:[#allocation8 + $0x8] sm:$0xff]
        %v403 = vld [vmem:[#allocation8 + $0x10] sm:$0xff]
        %v404 = vld [vmem:[#allocation8 + $0x18] sm:$0xff]
        %405 = vmatpush.msra.mxu0 0.0
        %406 = vmatpush.msra.mxu0 0.0
        %407 = vmatpush.msra.mxu0 0.0
        %408 = vmatpush.msra.mxu0 0.0
        %409 = vmatpush.msra.mxu0 0.0
        %410 = vmatpush.msra.mxu0 0.0
        %411 = vmatpush.msra.mxu0 0.0
        %412 = vmatpush.msra.mxu0 0.0
        %413 = vmatpush.msra.mxu0 0.0
        %414 = vmatpush.msra.mxu0 0.0
        %415 = vmatpush.msra.mxu0 0.0
        %416 = vmatpush.msra.mxu0 0.0
        %417 = vmatpush.msra.mxu0 %v404
        %418 = vmatpush.msra.mxu0 %v403
        %419 = vmatpush.msra.mxu0 %v402
        %420 = vmatpush.msra.mxu0 %v401
        %421 = vmatmul.f32.gmra.mxu0 %v356
        %v422 = vpop.f32.mrf.mxu0
        %v423 = vadd.f32 0.0, %v422
        %424 = vdwg.mxu0
        %v425 = vmul.f32 %v376, %v376
        %vm426 = vcmask 64512
        %v427 = vsel %vm426, %v425, 0.0
        %428 = vadd.xlane.f32.xlu0 %v427
        %v429 = vpop.xlane.xlu0 %428
        %v430 = vmul.f32 %v399, %v399
        %v431 = vsel %vm426, %v430, 0.0
        %432 = vadd.xlane.f32.xlu0 %v431
        %v433 = vpop.xlane.xlu0 %432
        %v435 = vsel %vm426, %v399, 0
        %v438 = vsel %vm426, %v376, 0
        %440 = vmatpush.xpose.msra.mxu0 0.0
        %441 = vmatpush.xpose.msra.mxu0 0.0
        %442 = vmatpush.xpose.msra.mxu0 0.0
        %443 = vmatpush.xpose.msra.mxu0 0.0
        %444 = vmatpush.xpose.msra.mxu0 0.0
        %445 = vmatpush.xpose.msra.mxu0 0.0
        %446 = vmatpush.xpose.msra.mxu0 0.0
        %447 = vmatpush.xpose.msra.mxu0 0.0
        %448 = vmatpush.xpose.msra.mxu0 0.0
        %449 = vmatpush.xpose.msra.mxu0 0.0
        %450 = vmatpush.xpose.msra.mxu0 0.0
        %451 = vmatpush.xpose.msra.mxu0 0.0
        %452 = vmatpush.xpose.msra.mxu0 0.0
        %453 = vmatpush.xpose.msra.mxu0 0.0
        %454 = vmatpush.xpose.msra.mxu0 0.0
        %455 = vmatpush.xpose.msra.mxu0 %v438
        %456 = vmatmul.f32.gmra.mxu0 %v435
        %v457 = vpop.f32.mrf.mxu0
        %v458 = vadd.f32 0.0, %v457
        %459 = vdwg.mxu0
        %460 = vxpose.xlu0.b32.start [1/16] %v429, 128
        %461 = vxpose.xlu0.b32.cont [2/16] 0.0, 128
        %462 = vxpose.xlu0.b32.cont [3/16] 0.0, 128
        %463 = vxpose.xlu0.b32.cont [4/16] 0.0, 128
        %464 = vxpose.xlu0.b32.cont [5/16] 0.0, 128
        %465 = vxpose.xlu0.b32.cont [6/16] 0.0, 128
        %466 = vxpose.xlu0.b32.cont [7/16] 0.0, 128
        %467 = vxpose.xlu0.b32.cont [8/16] 0.0, 128
        %468 = vxpose.xlu0.b32.cont [9/16] 0.0, 128
        %469 = vxpose.xlu0.b32.cont [10/16] 0.0, 128
        %470 = vxpose.xlu0.b32.cont [11/16] 0.0, 128
        %471 = vxpose.xlu0.b32.cont [12/16] 0.0, 128
        %472 = vxpose.xlu0.b32.cont [13/16] 0.0, 128
        %473 = vxpose.xlu0.b32.cont [14/16] 0.0, 128
        %474 = vxpose.xlu0.b32.cont [15/16] 0.0, 128
        %475 = vxpose.xlu0.b32.end [16/16] 0.0, 128
        %v476 = vpop.trf.xlu0
        %v477 = vpop.trf.xlu0
        %v478 = vpop.trf.xlu0
        %v479 = vpop.trf.xlu0
        %v480 = vpop.trf.xlu0
        %v481 = vpop.trf.xlu0
        %v482 = vpop.trf.xlu0
        %v483 = vpop.trf.xlu0
        %v484 = vpop.trf.xlu0
        %v485 = vpop.trf.xlu0
        %v486 = vpop.trf.xlu0
        %v487 = vpop.trf.xlu0
        %v488 = vpop.trf.xlu0
        %v489 = vpop.trf.xlu0
        %v490 = vpop.trf.xlu0
        %v491 = vpop.trf.xlu0
        %v492 = vperm.slane %v476, 0
        %v493 = vadd.f32 %v433, %v492
        %v494 = vmul.f32 %v458, 2.0
        %v495 = vsub.f32 %v493, %v494
        %v496 = vsub.f32 0.0, %v495
        %v497 = vmul.f32 %v496, 0.35355338
        %v498 = vsel %vm426, %v497, -inf
        %499 = vmax.xlane.f32.xlu0 %v498
        %v500 = vpop.xlane.xlu0 %499
        %v501 = vsub.f32 %v497, %v500
        %v502 = vmul.f32 %v501, 1.442695
        %v503 = vpow.pop %v502
        %v504 = vsel %vm426, %v503, 0.0
        %505 = vadd.xlane.f32.xlu0 %v504
        %v506 = vpop.xlane.xlu0 %505
        %v507 = vrcp.pop %v506
        %v508 = vmul.f32 %v503, %v507
        %509 = vst.msk [vmem:[%s345] sm:$0xff] %vm426, %v508
        %v511 = vsel %vm426, %v508, 0
        %513 = vmatpush.msra.mxu0 0.0
        %514 = vmatpush.msra.mxu0 0.0
        %515 = vmatpush.msra.mxu0 0.0
        %516 = vmatpush.msra.mxu0 0.0
        %517 = vmatpush.msra.mxu0 0.0
        %518 = vmatpush.msra.mxu0 0.0
        %519 = vmatpush.msra.mxu0 0.0
        %520 = vmatpush.msra.mxu0 0.0
        %521 = vmatpush.msra.mxu0 0.0
        %522 = vmatpush.msra.mxu0 0.0
        %523 = vmatpush.msra.mxu0 0.0
        %524 = vmatpush.msra.mxu0 0.0
        %525 = vmatpush.msra.mxu0 0.0
        %526 = vmatpush.msra.mxu0 0.0
        %527 = vmatpush.msra.mxu0 0.0
        %528 = vmatpush.msra.mxu0 %v423
        %529 = vmatmul.f32.gmra.mxu0 %v511
        %v530 = vpop.f32.mrf.mxu0
        %v531 = vadd.f32 0.0, %v530
        %532 = vdwg.mxu0
        %533 = vst.msk [vmem:[#allocation2] sm:$0xff] %vm426, %v531
        %535 = vrot.lane.b32.xlu0 %v425, 120
        %v536 = vpop.permute.xlu0 %535
        %v538 = vsel %vm426, %v536, 0.0
        %539 = vadd.xlane.f32.xlu0 %v538
        %v540 = vpop.xlane.xlu0 %539
        %542 = vrot.lane.b32.xlu0 %v430, 120
        %v543 = vpop.permute.xlu0 %542
        %v545 = vsel %vm426, %v543, 0.0
        %546 = vadd.xlane.f32.xlu0 %v545
        %v547 = vpop.xlane.xlu0 %546
        %548 = vrot.lane.b32.xlu0 %v399, 120
        %v549 = vpop.permute.xlu0 %548
        %550 = vrot.lane.b32.xlu0 %v376, 120
        %v551 = vpop.permute.xlu0 %550
        %v552 = vsel %vm426, %v549, 0
        %v554 = vsel %vm426, %v551, 0
        %556 = vmatpush.xpose.msra.mxu0 0.0
        %557 = vmatpush.xpose.msra.mxu0 0.0
        %558 = vmatpush.xpose.msra.mxu0 0.0
        %559 = vmatpush.xpose.msra.mxu0 0.0
        %560 = vmatpush.xpose.msra.mxu0 0.0
        %561 = vmatpush.xpose.msra.mxu0 0.0
        %562 = vmatpush.xpose.msra.mxu0 0.0
        %563 = vmatpush.xpose.msra.mxu0 0.0
        %564 = vmatpush.xpose.msra.mxu0 0.0
        %565 = vmatpush.xpose.msra.mxu0 0.0
        %566 = vmatpush.xpose.msra.mxu0 0.0
        %567 = vmatpush.xpose.msra.mxu0 0.0
        %568 = vmatpush.xpose.msra.mxu0 0.0
        %569 = vmatpush.xpose.msra.mxu0 0.0
        %570 = vmatpush.xpose.msra.mxu0 0.0
        %571 = vmatpush.xpose.msra.mxu0 %v554
        %572 = vmatmul.f32.gmra.mxu0 %v552
        %v573 = vpop.f32.mrf.mxu0
        %v574 = vadd.f32 0.0, %v573
        %575 = vdwg.mxu0
        %576 = vxpose.xlu0.b32.start [1/16] %v540, 128
        %577 = vxpose.xlu0.b32.cont [2/16] 0.0, 128
        %578 = vxpose.xlu0.b32.cont [3/16] 0.0, 128
        %579 = vxpose.xlu0.b32.cont [4/16] 0.0, 128
        %580 = vxpose.xlu0.b32.cont [5/16] 0.0, 128
        %581 = vxpose.xlu0.b32.cont [6/16] 0.0, 128
        %582 = vxpose.xlu0.b32.cont [7/16] 0.0, 128
        %583 = vxpose.xlu0.b32.cont [8/16] 0.0, 128
        %584 = vxpose.xlu0.b32.cont [9/16] 0.0, 128
        %585 = vxpose.xlu0.b32.cont [10/16] 0.0, 128
        %586 = vxpose.xlu0.b32.cont [11/16] 0.0, 128
        %587 = vxpose.xlu0.b32.cont [12/16] 0.0, 128
        %588 = vxpose.xlu0.b32.cont [13/16] 0.0, 128
        %589 = vxpose.xlu0.b32.cont [14/16] 0.0, 128
        %590 = vxpose.xlu0.b32.cont [15/16] 0.0, 128
        %591 = vxpose.xlu0.b32.end [16/16] 0.0, 128
        %v592 = vpop.trf.xlu0
        %v593 = vpop.trf.xlu0
        %v594 = vpop.trf.xlu0
        %v595 = vpop.trf.xlu0
        %v596 = vpop.trf.xlu0
        %v597 = vpop.trf.xlu0
        %v598 = vpop.trf.xlu0
        %v599 = vpop.trf.xlu0
        %v600 = vpop.trf.xlu0
        %v601 = vpop.trf.xlu0
        %v602 = vpop.trf.xlu0
        %v603 = vpop.trf.xlu0
        %v604 = vpop.trf.xlu0
        %v605 = vpop.trf.xlu0
        %v606 = vpop.trf.xlu0
        %v607 = vpop.trf.xlu0
        %v608 = vperm.slane %v592, 0
        %v609 = vadd.f32 %v547, %v608
        %v610 = vmul.f32 %v574, 2.0
        %v611 = vsub.f32 %v609, %v610
        %v612 = vsub.f32 0.0, %v611
        %v613 = vmul.f32 %v612, 0.35355338
        %v614 = vsel %vm426, %v613, -inf
        %615 = vmax.xlane.f32.xlu0 %v614
        %v616 = vpop.xlane.xlu0 %615
        %v617 = vsub.f32 %v613, %v616
        %v618 = vmul.f32 %v617, 1.442695
        %v619 = vpow.pop %v618
        %v620 = vsel %vm426, %v619, 0.0
        %621 = vadd.xlane.f32.xlu0 %v620
        %v622 = vpop.xlane.xlu0 %621
        %v623 = vrcp.pop %v622
        %v624 = vmul.f32 %v619, %v623
        %s625 = scalar_lea.vmem %s345, 8 [#allocation12]
        %626 = vst.msk [vmem:[%s625] sm:$0xff] %vm426, %v624
        %628 = vrot.lane.b32.xlu0 %v423, 120
        %v629 = vpop.permute.xlu0 %628
        %v632 = vsel %vm426, %v624, 0
        %634 = vmatpush.msra.mxu0 0.0
        %635 = vmatpush.msra.mxu0 0.0
        %636 = vmatpush.msra.mxu0 0.0
        %637 = vmatpush.msra.mxu0 0.0
        %638 = vmatpush.msra.mxu0 0.0
        %639 = vmatpush.msra.mxu0 0.0
        %640 = vmatpush.msra.mxu0 0.0
        %641 = vmatpush.msra.mxu0 0.0
        %642 = vmatpush.msra.mxu0 0.0
        %643 = vmatpush.msra.mxu0 0.0
        %644 = vmatpush.msra.mxu0 0.0
        %645 = vmatpush.msra.mxu0 0.0
        %646 = vmatpush.msra.mxu0 0.0
        %647 = vmatpush.msra.mxu0 0.0
        %648 = vmatpush.msra.mxu0 0.0
        %649 = vmatpush.msra.mxu0 %v629
        %650 = vmatmul.f32.gmra.mxu0 %v632
        %v651 = vpop.f32.mrf.mxu0
        %v652 = vadd.f32 0.0, %v651
        %653 = vdwg.mxu0
        %655 = vrot.lane.b32.xlu0 %v652, 8
        %v656 = vpop.permute.xlu0 %655
        %vm658 = vcmask 130112
        %659 = vst.msk [vmem:[#allocation2] sm:$0xff] %vm658, %v656
        %660 = vrot.lane.b32.xlu0 %v425, 112
        %v661 = vpop.permute.xlu0 %660
        %v663 = vsel %vm426, %v661, 0.0
        %664 = vadd.xlane.f32.xlu0 %v663
        %v665 = vpop.xlane.xlu0 %664
        %666 = vrot.lane.b32.xlu0 %v430, 112
        %v667 = vpop.permute.xlu0 %666
        %v669 = vsel %vm426, %v667, 0.0
        %670 = vadd.xlane.f32.xlu0 %v669
        %v671 = vpop.xlane.xlu0 %670
        %672 = vrot.lane.b32.xlu0 %v399, 112
        %v673 = vpop.permute.xlu0 %672
        %674 = vrot.lane.b32.xlu0 %v376, 112
        %v675 = vpop.permute.xlu0 %674
        %v676 = vsel %vm426, %v673, 0
        %v678 = vsel %vm426, %v675, 0
        %680 = vmatpush.xpose.msra.mxu0 0.0
        %681 = vmatpush.xpose.msra.mxu0 0.0
        %682 = vmatpush.xpose.msra.mxu0 0.0
        %683 = vmatpush.xpose.msra.mxu0 0.0
        %684 = vmatpush.xpose.msra.mxu0 0.0
        %685 = vmatpush.xpose.msra.mxu0 0.0
        %686 = vmatpush.xpose.msra.mxu0 0.0
        %687 = vmatpush.xpose.msra.mxu0 0.0
        %688 = vmatpush.xpose.msra.mxu0 0.0
        %689 = vmatpush.xpose.msra.mxu0 0.0
        %690 = vmatpush.xpose.msra.mxu0 0.0
        %691 = vmatpush.xpose.msra.mxu0 0.0
        %692 = vmatpush.xpose.msra.mxu0 0.0
        %693 = vmatpush.xpose.msra.mxu0 0.0
        %694 = vmatpush.xpose.msra.mxu0 0.0
        %695 = vmatpush.xpose.msra.mxu0 %v678
        %696 = vmatmul.f32.gmra.mxu0 %v676
        %v697 = vpop.f32.mrf.mxu0
        %v698 = vadd.f32 0.0, %v697
        %699 = vdwg.mxu0
        %700 = vxpose.xlu0.b32.start [1/16] %v665, 128
        %701 = vxpose.xlu0.b32.cont [2/16] 0.0, 128
        %702 = vxpose.xlu0.b32.cont [3/16] 0.0, 128
        %703 = vxpose.xlu0.b32.cont [4/16] 0.0, 128
        %704 = vxpose.xlu0.b32.cont [5/16] 0.0, 128
        %705 = vxpose.xlu0.b32.cont [6/16] 0.0, 128
        %706 = vxpose.xlu0.b32.cont [7/16] 0.0, 128
        %707 = vxpose.xlu0.b32.cont [8/16] 0.0, 128
        %708 = vxpose.xlu0.b32.cont [9/16] 0.0, 128
        %709 = vxpose.xlu0.b32.cont [10/16] 0.0, 128
        %710 = vxpose.xlu0.b32.cont [11/16] 0.0, 128
        %711 = vxpose.xlu0.b32.cont [12/16] 0.0, 128
        %712 = vxpose.xlu0.b32.cont [13/16] 0.0, 128
        %713 = vxpose.xlu0.b32.cont [14/16] 0.0, 128
        %714 = vxpose.xlu0.b32.cont [15/16] 0.0, 128
        %715 = vxpose.xlu0.b32.end [16/16] 0.0, 128
        %v716 = vpop.trf.xlu0
        %v717 = vpop.trf.xlu0
        %v718 = vpop.trf.xlu0
        %v719 = vpop.trf.xlu0
        %v720 = vpop.trf.xlu0
        %v721 = vpop.trf.xlu0
        %v722 = vpop.trf.xlu0
        %v723 = vpop.trf.xlu0
        %v724 = vpop.trf.xlu0
        %v725 = vpop.trf.xlu0
        %v726 = vpop.trf.xlu0
        %v727 = vpop.trf.xlu0
        %v728 = vpop.trf.xlu0
        %v729 = vpop.trf.xlu0
        %v730 = vpop.trf.xlu0
        %v731 = vpop.trf.xlu0
        %v732 = vperm.slane %v716, 0
        %v733 = vadd.f32 %v671, %v732
        %v734 = vmul.f32 %v698, 2.0
        %v735 = vsub.f32 %v733, %v734
        %v736 = vsub.f32 0.0, %v735
        %v737 = vmul.f32 %v736, 0.35355338
        %v738 = vsel %vm426, %v737, -inf
        %739 = vmax.xlane.f32.xlu0 %v738
        %v740 = vpop.xlane.xlu0 %739
        %v741 = vsub.f32 %v737, %v740
        %v742 = vmul.f32 %v741, 1.442695
        %v743 = vpow.pop %v742
        %v744 = vsel %vm426, %v743, 0.0
        %745 = vadd.xlane.f32.xlu0 %v744
        %v746 = vpop.xlane.xlu0 %745
        %v747 = vrcp.pop %v746
        %v748 = vmul.f32 %v743, %v747
        %s749 = scalar_lea.vmem %s345, 16 [#allocation12]
        %750 = vst.msk [vmem:[%s749] sm:$0xff] %vm426, %v748
        %751 = vrot.lane.b32.xlu0 %v423, 112
        %v752 = vpop.permute.xlu0 %751
        %v755 = vsel %vm426, %v748, 0
        %757 = vmatpush.msra.mxu0 0.0
        %758 = vmatpush.msra.mxu0 0.0
        %759 = vmatpush.msra.mxu0 0.0
        %760 = vmatpush.msra.mxu0 0.0
        %761 = vmatpush.msra.mxu0 0.0
        %762 = vmatpush.msra.mxu0 0.0
        %763 = vmatpush.msra.mxu0 0.0
        %764 = vmatpush.msra.mxu0 0.0
        %765 = vmatpush.msra.mxu0 0.0
        %766 = vmatpush.msra.mxu0 0.0
        %767 = vmatpush.msra.mxu0 0.0
        %768 = vmatpush.msra.mxu0 0.0
        %769 = vmatpush.msra.mxu0 0.0
        %770 = vmatpush.msra.mxu0 0.0
        %771 = vmatpush.msra.mxu0 0.0
        %772 = vmatpush.msra.mxu0 %v752
        %773 = vmatmul.f32.gmra.mxu0 %v755
        %v774 = vpop.f32.mrf.mxu0
        %v775 = vadd.f32 0.0, %v774
        %776 = vdwg.mxu0
        %778 = vrot.lane.b32.xlu0 %v775, 16
        %v779 = vpop.permute.xlu0 %778
        %vm781 = vcmask 195712
        %782 = vst.msk [vmem:[#allocation2] sm:$0xff] %vm781, %v779
        %783 = vrot.lane.b32.xlu0 %v425, 104
        %v784 = vpop.permute.xlu0 %783
        %v786 = vsel %vm426, %v784, 0.0
        %787 = vadd.xlane.f32.xlu0 %v786
        %v788 = vpop.xlane.xlu0 %787
        %789 = vrot.lane.b32.xlu0 %v430, 104
        %v790 = vpop.permute.xlu0 %789
        %v792 = vsel %vm426, %v790, 0.0
        %793 = vadd.xlane.f32.xlu0 %v792
        %v794 = vpop.xlane.xlu0 %793
        %795 = vrot.lane.b32.xlu0 %v399, 104
        %v796 = vpop.permute.xlu0 %795
        %797 = vrot.lane.b32.xlu0 %v376, 104
        %v798 = vpop.permute.xlu0 %797
        %v799 = vsel %vm426, %v796, 0
        %v801 = vsel %vm426, %v798, 0
        %803 = vmatpush.xpose.msra.mxu0 0.0
        %804 = vmatpush.xpose.msra.mxu0 0.0
        %805 = vmatpush.xpose.msra.mxu0 0.0
        %806 = vmatpush.xpose.msra.mxu0 0.0
        %807 = vmatpush.xpose.msra.mxu0 0.0
        %808 = vmatpush.xpose.msra.mxu0 0.0
        %809 = vmatpush.xpose.msra.mxu0 0.0
        %810 = vmatpush.xpose.msra.mxu0 0.0
        %811 = vmatpush.xpose.msra.mxu0 0.0
        %812 = vmatpush.xpose.msra.mxu0 0.0
        %813 = vmatpush.xpose.msra.mxu0 0.0
        %814 = vmatpush.xpose.msra.mxu0 0.0
        %815 = vmatpush.xpose.msra.mxu0 0.0
        %816 = vmatpush.xpose.msra.mxu0 0.0
        %817 = vmatpush.xpose.msra.mxu0 0.0
        %818 = vmatpush.xpose.msra.mxu0 %v801
        %819 = vmatmul.f32.gmra.mxu0 %v799
        %v820 = vpop.f32.mrf.mxu0
        %v821 = vadd.f32 0.0, %v820
        %822 = vdwg.mxu0
        %823 = vxpose.xlu0.b32.start [1/16] %v788, 128
        %824 = vxpose.xlu0.b32.cont [2/16] 0.0, 128
        %825 = vxpose.xlu0.b32.cont [3/16] 0.0, 128
        %826 = vxpose.xlu0.b32.cont [4/16] 0.0, 128
        %827 = vxpose.xlu0.b32.cont [5/16] 0.0, 128
        %828 = vxpose.xlu0.b32.cont [6/16] 0.0, 128
        %829 = vxpose.xlu0.b32.cont [7/16] 0.0, 128
        %830 = vxpose.xlu0.b32.cont [8/16] 0.0, 128
        %831 = vxpose.xlu0.b32.cont [9/16] 0.0, 128
        %832 = vxpose.xlu0.b32.cont [10/16] 0.0, 128
        %833 = vxpose.xlu0.b32.cont [11/16] 0.0, 128
        %834 = vxpose.xlu0.b32.cont [12/16] 0.0, 128
        %835 = vxpose.xlu0.b32.cont [13/16] 0.0, 128
        %836 = vxpose.xlu0.b32.cont [14/16] 0.0, 128
        %837 = vxpose.xlu0.b32.cont [15/16] 0.0, 128
        %838 = vxpose.xlu0.b32.end [16/16] 0.0, 128
        %v839 = vpop.trf.xlu0
        %v840 = vpop.trf.xlu0
        %v841 = vpop.trf.xlu0
        %v842 = vpop.trf.xlu0
        %v843 = vpop.trf.xlu0
        %v844 = vpop.trf.xlu0
        %v845 = vpop.trf.xlu0
        %v846 = vpop.trf.xlu0
        %v847 = vpop.trf.xlu0
        %v848 = vpop.trf.xlu0
        %v849 = vpop.trf.xlu0
        %v850 = vpop.trf.xlu0
        %v851 = vpop.trf.xlu0
        %v852 = vpop.trf.xlu0
        %v853 = vpop.trf.xlu0
        %v854 = vpop.trf.xlu0
        %v855 = vperm.slane %v839, 0
        %v856 = vadd.f32 %v794, %v855
        %v857 = vmul.f32 %v821, 2.0
        %v858 = vsub.f32 %v856, %v857
        %v859 = vsub.f32 0.0, %v858
        %v860 = vmul.f32 %v859, 0.35355338
        %v861 = vsel %vm426, %v860, -inf
        %862 = vmax.xlane.f32.xlu0 %v861
        %v863 = vpop.xlane.xlu0 %862
        %v864 = vsub.f32 %v860, %v863
        %v865 = vmul.f32 %v864, 1.442695
        %v866 = vpow.pop %v865
        %v867 = vsel %vm426, %v866, 0.0
        %868 = vadd.xlane.f32.xlu0 %v867
        %v869 = vpop.xlane.xlu0 %868
        %v870 = vrcp.pop %v869
        %v871 = vmul.f32 %v866, %v870
        %s872 = scalar_lea.vmem %s345, 24 [#allocation12]
        %873 = vst.msk [vmem:[%s872] sm:$0xff] %vm426, %v871
        %874 = vrot.lane.b32.xlu0 %v423, 104
        %v875 = vpop.permute.xlu0 %874
        %v878 = vsel %vm426, %v871, 0
        %880 = vmatpush.msra.mxu0 0.0
        %881 = vmatpush.msra.mxu0 0.0
        %882 = vmatpush.msra.mxu0 0.0
        %883 = vmatpush.msra.mxu0 0.0
        %884 = vmatpush.msra.mxu0 0.0
        %885 = vmatpush.msra.mxu0 0.0
        %886 = vmatpush.msra.mxu0 0.0
        %887 = vmatpush.msra.mxu0 0.0
        %888 = vmatpush.msra.mxu0 0.0
        %889 = vmatpush.msra.mxu0 0.0
        %890 = vmatpush.msra.mxu0 0.0
        %891 = vmatpush.msra.mxu0 0.0
        %892 = vmatpush.msra.mxu0 0.0
        %893 = vmatpush.msra.mxu0 0.0
        %894 = vmatpush.msra.mxu0 0.0
        %895 = vmatpush.msra.mxu0 %v875
        %896 = vmatmul.f32.gmra.mxu0 %v878
        %v897 = vpop.f32.mrf.mxu0
        %v898 = vadd.f32 0.0, %v897
        %899 = vdwg.mxu0
        %901 = vrot.lane.b32.xlu0 %v898, 24
        %v902 = vpop.permute.xlu0 %901
        %vm904 = vcmask 261312
        %905 = vst.msk [vmem:[#allocation2] sm:$0xff] %vm904, %v902
        %v906 = vld [vmem:[#allocation2] sm:$0xff]
        %v907 = vld [vmem:[#allocation9] sm:$0xff]
        %v908 = vld [vmem:[#allocation9 + $0x8] sm:$0xff]
        %v909 = vld [vmem:[#allocation9 + $0x10] sm:$0xff]
        %v910 = vld [vmem:[#allocation9 + $0x18] sm:$0xff]
        %v911 = vld [vmem:[%s4] sm:$0x1]
        %v913 = vperm.slane %v911, 0
        %v916 = vsel %vm354, %v906, 0
        %918 = vmatpush.msra.mxu0 0.0
        %919 = vmatpush.msra.mxu0 0.0
        %920 = vmatpush.msra.mxu0 0.0
        %921 = vmatpush.msra.mxu0 0.0
        %922 = vmatpush.msra.mxu0 0.0
        %923 = vmatpush.msra.mxu0 0.0
        %924 = vmatpush.msra.mxu0 0.0
        %925 = vmatpush.msra.mxu0 0.0
        %926 = vmatpush.msra.mxu0 0.0
        %927 = vmatpush.msra.mxu0 0.0
        %928 = vmatpush.msra.mxu0 0.0
        %929 = vmatpush.msra.mxu0 0.0
        %930 = vmatpush.msra.mxu0 %v910
        %931 = vmatpush.msra.mxu0 %v909
        %932 = vmatpush.msra.mxu0 %v908
        %933 = vmatpush.msra.mxu0 %v907
        %934 = vmatmul.f32.gmra.mxu0 %v916
        %v935 = vpop.f32.mrf.mxu0
        %v936 = vadd.f32 %v913, %v935
        %937 = vdwg.mxu0
        %938 = vst.msk [vmem:[%s338] sm:$0xff] %vm354, %v936
        %s939 = sand.u32 %s161, 1
        %s940 = scalar_lea.sflag [#allocation5], %s939
        %s941 = sand.u32 %s161, 1
        %s942 = smul.addr %s941, 8
        %s943 = scalar_lea.vmem [#allocation11], %s942
        %s944 = sand.u32 %s189, 1
        %s945 = scalar_lea.sflag [#allocation13], %s944
        %s946 = sand.u32 %s189, 1
        %s947 = smul.addr %s946, 32
        %s948 = scalar_lea.vmem [#allocation12], %s947
        // Predicated region
        $region57: #{tpu_custom_call.1} parent=39 // pred_check
          %p949 = pneg %p171
        $region58: #{tpu_custom_call.1} parent=39 // pred_check_branch
          %951 = sbr.rel (%p949) target = $region60
        $region59: #{tpu_custom_call.1} parent=39 // pred_region
          %953 = vsyncadd %s940, 0
          %s954 = sadd.s32 %s34, %s33
          %s955 = smul.addr %s954, 8
          %s956 = scalar_lea.hbm %s5, %s955
          %s958 = sshll.u32 %s943, 4
          %s959 = int_to_ptr.vmem [resolvable:$true] %s958
          %s960 = sshll.u32 %s956, 4
          %s961 = int_to_ptr.hbm [resolvable:$true] %s960
          %963 = dma.vmem_to_hbm [thread:$0]  %s959, 128, %s961, %s940
        $region60: #{tpu_custom_call.1} parent=39 // pred_fallthru
          _
        // Predicated region
        $region61: #{tpu_custom_call.1} parent=39 // pred_check
          %p964 = pneg %p199
        $region62: #{tpu_custom_call.1} parent=39 // pred_check_branch
          %966 = sbr.rel (%p964) target = $region64
        $region63: #{tpu_custom_call.1} parent=39 // pred_region
          %968 = vsyncadd %s945, 0
          %s969 = smul.addr %s33, 4
          %s970 = sadd.s32 %s34, %s969
          %s971 = smul.addr %s970, 8
          %s972 = scalar_lea.hbm %s6, %s971
          %s973 = sshll.u32 %s948, 4
          %s974 = int_to_ptr.vmem [resolvable:$true] %s973
          %s975 = sshll.u32 %s972, 4
          %s976 = int_to_ptr.hbm [resolvable:$true] %s975
          %981 = dma.vmem_to_hbm [thread:$0]  %s974, 512, %s976, %s945, 128, 128, 8
        $region64: #{tpu_custom_call.1} parent=39 // pred_fallthru
          _
      $region40: #{tpu_custom_call.1} parent=5 // pred_fallthru
        _
      %p982 = scmp.le.s32.totalorder 2, %s24
      // Predicated region
      $region65: #{tpu_custom_call.1} parent=5 // pred_check
        %p983 = pneg %p982
      $region66: #{tpu_custom_call.1} parent=5 // pred_check_branch
        %985 = sbr.rel (%p983) target = $region68
      $region67: #{tpu_custom_call.1} parent=5 // pred_region
        %s986 = ssub.s32 %s24, 2
        // Predicated region
        $region69: #{tpu_custom_call.1} parent=67 // pred_check
          %p987 = pneg %p177
        $region70: #{tpu_custom_call.1} parent=67 // pred_check_branch
          %989 = sbr.rel (%p987) target = $region72
        $region71: #{tpu_custom_call.1} parent=67 // pred_region
          %s990 = sand.u32 %s162, 1
          %s991 = scalar_lea.sflag [#allocation5], %s990
          %s992 = sand.u32 %s162, 1
          %s993 = smul.addr %s992, 8
          %s994 = scalar_lea.vmem [#allocation11], %s993
          %996 = dma.done %s991, 128
        $region72: #{tpu_custom_call.1} parent=67 // pred_fallthru
          _
        // Predicated region
        $region73: #{tpu_custom_call.1} parent=67 // pred_check
          %p997 = pneg %p205
        $region74: #{tpu_custom_call.1} parent=67 // pred_check_branch
          %999 = sbr.rel (%p997) target = $region76
        $region75: #{tpu_custom_call.1} parent=67 // pred_region
          %s1000 = sand.u32 %s190, 1
          %s1001 = scalar_lea.sflag [#allocation13], %s1000
          %s1002 = sand.u32 %s190, 1
          %s1003 = smul.addr %s1002, 32
          %s1004 = scalar_lea.vmem [#allocation12], %s1003
          %1006 = dma.done %s1001, 512
        $region76: #{tpu_custom_call.1} parent=67 // pred_fallthru
          _
      $region68: #{tpu_custom_call.1} parent=5 // pred_fallthru
        _
    $region6: #{tpu_custom_call.1} parent=1 // loop_footer
      %s28 = sadd.s32 1, %s24
    $region7: #{tpu_custom_call.1} parent=1 // loop_footer_branch
      %23 = sbr.rel target = $region3
    $region8: #{tpu_custom_call.1} parent=1 // loop_exit
      _
    %1007 = vsyncpa [#allocation4], 1
    %s1008 = scalar_lea.sflag [#allocation4], 1
    %1009 = vsyncpa %s1008, 1
    %1010 = vsyncpa [#allocation7], 1
    %1011 = vsyncpa [#allocation10], 1
    %1012 = vsyncpa [#allocation5], 1
    %s1013 = scalar_lea.sflag [#allocation5], 1
    %1014 = vsyncpa %s1013, 1
    %1015 = vsyncpa [#allocation13], 1
    %s1016 = scalar_lea.sflag [#allocation13], 1
    %1017 = vsyncpa %s1016, 1

</llo_original>
